<compile_context>
chip_gen: v7x
topology: tpu7x:2x2x1
jax: 0.10.0
libtpu: 0.0.40
codegen_flags: <defaults>
</compile_context>

<pallas_src>
import jax
import jax.numpy as jnp
from jax.experimental import pallas as pl
from jax.experimental.pallas import tpu as pltpu


def _mlp_kernel(x_ref, w1_ref, b1_ref, w2_ref, b2_ref, o_ref):
    # Layer 1: bf16 operands on the MXU, f32 accumulation.
    h = jnp.dot(x_ref[...], w1_ref[...], preferred_element_type=jnp.float32)
    # Bias + ReLU in f32 on the VPU (b1 is (1, H), broadcasts over rows).
    h = jnp.maximum(h + b1_ref[...], 0.0)
    # Layer 2: downcast the f32 activations to bf16 for the MXU operand only;
    # accumulation stays f32 (deliberate, standard precision trade-off).
    out = jnp.dot(h.astype(w2_ref.dtype), w2_ref[...],
                  preferred_element_type=jnp.float32)
    o_ref[...] = (out + b2_ref[...]).astype(o_ref.dtype)


def _round_up(v, m):
    return ((v + m - 1) // m) * m


def mlp_forward(x, w1, b1, w2, b2, *, block_b=512):
    """x: (B, K), w1: (K, H), b1: (1, H), w2: (H, N), b2: (1, N) -> (B, N) f32."""
    B, K = x.shape
    H = w1.shape[1]
    N = w2.shape[1]

    # Lane-dense / MXU-friendly padding (zeros are exact for this MLP).
    K_pad = _round_up(max(K, 128), 128)
    H_pad = _round_up(max(H, 128), 128)
    N_pad = _round_up(max(N, 128), 128)

    # Batch tile: multiple of 8 sublanes, capped at block_b rows.
    B8 = _round_up(B, 8)
    TB = block_b if B8 >= block_b else B8
    B_pad = _round_up(B8, TB)

    compute_dtype = jnp.bfloat16
    x_p = jnp.zeros((B_pad, K_pad), compute_dtype).at[:B, :K].set(
        x.astype(compute_dtype))
    w1_p = jnp.zeros((K_pad, H_pad), compute_dtype).at[:K, :H].set(
        w1.astype(compute_dtype))
    b1_p = jnp.zeros((1, H_pad), jnp.float32).at[:, :H].set(
        b1.astype(jnp.float32))
    w2_p = jnp.zeros((H_pad, N_pad), compute_dtype).at[:H, :N].set(
        w2.astype(compute_dtype))
    b2_p = jnp.zeros((1, N_pad), jnp.float32).at[:, :N].set(
        b2.astype(jnp.float32))

    grid = (pl.cdiv(B_pad, TB),)

    out_padded = pl.pallas_call(
        _mlp_kernel,
        out_shape=jax.ShapeDtypeStruct((B_pad, N_pad), jnp.float32),
        grid_spec=pl.GridSpec(
            grid=grid,
            in_specs=[
                pl.BlockSpec((TB, K_pad), lambda i: (i, 0)),      # x: batch-tiled
                pl.BlockSpec((K_pad, H_pad), lambda i: (0, 0)),   # W1: resident
                pl.BlockSpec((1, H_pad), lambda i: (0, 0)),       # b1: resident
                pl.BlockSpec((H_pad, N_pad), lambda i: (0, 0)),   # W2: resident
                pl.BlockSpec((1, N_pad), lambda i: (0, 0)),       # b2: resident
            ],
            out_specs=pl.BlockSpec((TB, N_pad), lambda i: (i, 0)),
        ),
        compiler_params=pltpu.CompilerParams(
            dimension_semantics=("parallel",),          # v7x: use both TCs
            vmem_limit_bytes=32 * 1024 * 1024,          # raise v5e's 16 MiB default
        ),
    )(x_p, w1_p, b1_p, w2_p, b2_p)

    # Strip batch / lane padding to recover the true (B, N) result.
    return out_padded[:B, :N]


def init_params(key, inputs_size, output_size, hidden_size=640,
                dtype=jnp.float32):
    """Deterministic init mimicking nn.Linear (uniform +/- 1/sqrt(fan_in))."""
    k1, k2, k3, k4 = jax.random.split(key, 4)
    bound1 = 1.0 / (inputs_size ** 0.5)
    bound2 = 1.0 / (hidden_size ** 0.5)
    w1 = jax.random.uniform(k1, (inputs_size, hidden_size), dtype,
                            minval=-bound1, maxval=bound1)
    b1 = jax.random.uniform(k2, (1, hidden_size), dtype,
                            minval=-bound1, maxval=bound1)
    w2 = jax.random.uniform(k3, (hidden_size, output_size), dtype,
                            minval=-bound2, maxval=bound2)
    b2 = jax.random.uniform(k4, (1, output_size), dtype,
                            minval=-bound2, maxval=bound2)
    return w1, b1, w2, b2


if __name__ == "__main__":
    # Small shapes consistent with the module: batch=8, inputsSize=32,
    # hiddenSize=640 (module default), outputSize=16.
    batch, inputs_size, hidden_size, output_size = 8, 32, 640, 16

    key = jax.random.PRNGKey(0)
    kx, kp = jax.random.split(key)
    x = jax.random.normal(kx, (batch, inputs_size), dtype=jnp.float32)
    w1, b1, w2, b2 = init_params(kp, inputs_size, output_size, hidden_size)

    out = mlp_forward(x, w1, b1, w2, b2)
    out = jax.block_until_ready(out)
    assert out.shape == (batch, output_size)

    # Pure-JAX f32 reference; kernel uses bf16 MXU operands with f32
    # accumulation, so allow a bf16-scale tolerance.
    ref = jnp.maximum(x @ w1 + b1, 0.0) @ w2 + b2
    assert jnp.allclose(out, ref, atol=3e-2, rtol=3e-2), (
        float(jnp.max(jnp.abs(out - ref))))

    print("KERNEL_OK")
</pallas_src>

<mosaic_0001>
module attributes {stable_mosaic.version = 11 : i64} {
  func.func @_mlp_kernel(%arg0: i32, %arg1: memref<8x128xbf16, #tpu.memory_space<vmem>>, %arg2: memref<128x640xbf16, #tpu.memory_space<vmem>>, %arg3: memref<1x640xf32, #tpu.memory_space<vmem>>, %arg4: memref<640x128xbf16, #tpu.memory_space<vmem>>, %arg5: memref<1x128xf32, #tpu.memory_space<vmem>>, %arg6: memref<8x128xf32, #tpu.memory_space<vmem>>) attributes {dimension_semantics = [#tpu.dimension_semantics<parallel>], iteration_bounds = array<i64: 1>, scalar_prefetch = 0 : i64, scratch_operands = 0 : i64, tpu.core_type = #tpu.core_type<tc>, window_params = [{transform_indices = @transform_0, window_bounds = array<i64: 8, 128>}, {pipeline_mode = #tpu.pipeline_mode<synchronous>, transform_indices = @transform_1, window_bounds = array<i64: 128, 640>}, {pipeline_mode = #tpu.pipeline_mode<synchronous>, transform_indices = @transform_2, window_bounds = array<i64: 1, 640>}, {pipeline_mode = #tpu.pipeline_mode<synchronous>, transform_indices = @transform_3, window_bounds = array<i64: 640, 128>}, {pipeline_mode = #tpu.pipeline_mode<synchronous>, transform_indices = @transform_4, window_bounds = array<i64: 1, 128>}, {transform_indices = @transform_5, window_bounds = array<i64: 8, 128>}]} {
    %c0 = arith.constant 0 : index
    %c0_0 = arith.constant 0 : index
    %0 = vector.load %arg1[%c0, %c0_0] : memref<8x128xbf16, #tpu.memory_space<vmem>>, vector<8x128xbf16>
    %c0_1 = arith.constant 0 : index
    %c0_2 = arith.constant 0 : index
    %1 = vector.load %arg2[%c0_1, %c0_2] : memref<128x640xbf16, #tpu.memory_space<vmem>>, vector<128x640xbf16>
    %cst = arith.constant dense<0.000000e+00> : vector<8x640xf32>
    %2 = tpu.matmul %0, %1, %cst {dimension_numbers = #tpu.dot_dimension_numbers<[1], [0], [0], [1], [0, 0, 1, 1], [], []>} : vector<8x128xbf16>, vector<128x640xbf16>, vector<8x640xf32> -> vector<8x640xf32>
    %c0_3 = arith.constant 0 : index
    %c0_4 = arith.constant 0 : index
    %3 = vector.load %arg3[%c0_3, %c0_4] : memref<1x640xf32, #tpu.memory_space<vmem>>, vector<1x640xf32>
    %4 = vector.broadcast %3 : vector<1x640xf32> to vector<8x640xf32>
    %5 = arith.addf %2, %4 : vector<8x640xf32>
    %cst_5 = arith.constant 0.000000e+00 : f32
    %6 = vector.broadcast %cst_5 : f32 to vector<8x640xf32>
    %7 = arith.maximumf %5, %6 : vector<8x640xf32>
    %8 = arith.truncf %7 : vector<8x640xf32> to vector<8x640xbf16>
    %c0_6 = arith.constant 0 : index
    %c0_7 = arith.constant 0 : index
    %9 = vector.load %arg4[%c0_6, %c0_7] : memref<640x128xbf16, #tpu.memory_space<vmem>>, vector<640x128xbf16>
    %cst_8 = arith.constant dense<0.000000e+00> : vector<8x128xf32>
    %10 = tpu.matmul %8, %9, %cst_8 {dimension_numbers = #tpu.dot_dimension_numbers<[1], [0], [0], [1], [0, 0, 1, 1], [], []>} : vector<8x640xbf16>, vector<640x128xbf16>, vector<8x128xf32> -> vector<8x128xf32>
    %c0_9 = arith.constant 0 : index
    %c0_10 = arith.constant 0 : index
    %11 = vector.load %arg5[%c0_9, %c0_10] : memref<1x128xf32, #tpu.memory_space<vmem>>, vector<1x128xf32>
    %12 = vector.broadcast %11 : vector<1x128xf32> to vector<8x128xf32>
    %13 = arith.addf %10, %12 : vector<8x128xf32>
    %c0_11 = arith.constant 0 : index
    %c0_12 = arith.constant 0 : index
    %14 = vector.load %arg6[%c0_11, %c0_12] : memref<8x128xf32, #tpu.memory_space<vmem>>, vector<8x128xf32>
    tpu.vector_store %arg6[%c0_11, %c0_12], %13 {strides = array<i32>} : memref<8x128xf32, #tpu.memory_space<vmem>>, vector<8x128xf32>,
    return
  }
  func.func @transform_0(%arg0: i32) -> (i32, i32) {
    %c0_i32 = arith.constant 0 : i32
    %c0_i32_0 = arith.constant 0 : i32
    return %arg0, %c0_i32 : i32, i32
  }
  func.func @transform_1(%arg0: i32) -> (i32, i32) {
    %c0_i32 = arith.constant 0 : i32
    %c0_i32_0 = arith.constant 0 : i32
    %c0_i32_1 = arith.constant 0 : i32
    return %c0_i32, %c0_i32_0 : i32, i32
  }
  func.func @transform_2(%arg0: i32) -> (i32, i32) {
    %c0_i32 = arith.constant 0 : i32
    %c0_i32_0 = arith.constant 0 : i32
    %c0_i32_1 = arith.constant 0 : i32
    return %c0_i32, %c0_i32_0 : i32, i32
  }
  func.func @transform_3(%arg0: i32) -> (i32, i32) {
    %c0_i32 = arith.constant 0 : i32
    %c0_i32_0 = arith.constant 0 : i32
    %c0_i32_1 = arith.constant 0 : i32
    return %c0_i32, %c0_i32_0 : i32, i32
  }
  func.func @transform_4(%arg0: i32) -> (i32, i32) {
    %c0_i32 = arith.constant 0 : i32
    %c0_i32_0 = arith.constant 0 : i32
    %c0_i32_1 = arith.constant 0 : i32
    return %c0_i32, %c0_i32_0 : i32, i32
  }
  func.func @transform_5(%arg0: i32) -> (i32, i32) {
    %c0_i32 = arith.constant 0 : i32
    %c0_i32_0 = arith.constant 0 : i32
    return %arg0, %c0_i32 : i32, i32
  }
}

</mosaic_0001>

<llo_original>
// kernel: tpu_custom_call.1
$region0: #{tpu_custom_call.1}
  #allocation0 [shape = 'u32[]', space=smem, size = 0x4, offset = 0x4, fixed_abs, tag = 'smem constant byte address 0x4 - core index']
  #allocation1 [shape = 'u32[144,128]{1,0:T(1,128)}', space=vmem, size = 0x12000, scoped, tag = 'internal scratch']
  %s0 = inlined_call_operand.hbm [shape: bf16[8,128], index: 0, kind: input, shape index: {}]
  %s1 = inlined_call_operand.hbm [shape: bf16[128,640], index: 1, kind: input, shape index: {}]
  %s2 = inlined_call_operand.vmem [shape: f32[1,640], index: 2, kind: input, shape index: {}]
  %s3 = inlined_call_operand.hbm [shape: bf16[640,128], index: 3, kind: input, shape index: {}]
  %s4 = inlined_call_operand.vmem [shape: f32[1,128], index: 4, kind: input, shape index: {}]
  %s5 = inlined_call_operand.hbm [shape: f32[8,128], index: 5, kind: output, shape index: {}]
  %s6 = sld [smem:[#allocation0]]
  $region42: #{tpu_custom_call.1} parent=0
    _
  %s8 = ssub.s32 1, %s6
  %s9 = scalar_select 0, %s8, %s6
  $region1: #{tpu_custom_call.1} parent=0
    #allocation2 [shape = 'u8[2048]{0}', space=vmem, size = 0x800, scoped, tag = 'input window, operand 0, single buffered']
    #allocation3 [shape = 's32[1]{0}', space=sflag, size = 0x4, scoped, tag = 'scoped memory for tpu_custom_call.1']
    #allocation4 [shape = 's32[1]{0}', space=sflag, size = 0x4, scoped, tag = 'scoped memory for tpu_custom_call.1']
    #allocation5 [shape = 'u8[163840]{0}', space=vmem, size = 0x28000, scoped, tag = 'input window, operand 1, single buffered']
    #allocation6 [shape = 's32[1]{0}', space=sflag, size = 0x4, scoped, tag = 'scoped memory for tpu_custom_call.1']
    #allocation7 [shape = 'u8[163840]{0}', space=vmem, size = 0x28000, scoped, tag = 'input window, operand 3, single buffered']
    #allocation8 [shape = 'u8[4096]{0}', space=vmem, size = 0x1000, scoped, tag = 'output window, operand 0, single buffered']
    %10 = vsyncpa [#allocation3], 0
    %11 = vsyncpa [#allocation6], 0
    %12 = vsyncpa [#allocation4], 0
    // Predicated region
    $region2: #{tpu_custom_call.1} parent=1 // pred_check
      _
    $region3: #{tpu_custom_call.1} parent=1 // pred_check_branch
      %14 = sbr.rel (0) target = $region5
    $region4: #{tpu_custom_call.1} parent=1 // pred_region
      %s16 = ssub.s32 64, 64
      %17 = vsyncadd [#allocation3], %s16
      %s19 = sshll.u32 [#allocation2], 4
      %s20 = int_to_ptr.vmem [resolvable:$true] %s19
      %22 = dma.hbm_to_vmem [thread:$0]  %s0, 64, %s20, [#allocation3]
    $region5: #{tpu_custom_call.1} parent=1 // pred_fallthru
      _
    // Predicated region
    $region6: #{tpu_custom_call.1} parent=1 // pred_check
      _
    $region7: #{tpu_custom_call.1} parent=1 // pred_check_branch
      %24 = sbr.rel (0) target = $region9
    $region8: #{tpu_custom_call.1} parent=1 // pred_region
      %s26 = ssub.s32 5120, 5120
      %27 = vsyncadd [#allocation6], %s26
      %s28 = sshll.u32 [#allocation5], 4
      %s29 = int_to_ptr.vmem [resolvable:$true] %s28
      %34 = dma.hbm_to_vmem [thread:$0]  %s1, 5120, %s29, [#allocation6], 320, 320, 20
    $region9: #{tpu_custom_call.1} parent=1 // pred_fallthru
      _
    // Predicated region
    $region10: #{tpu_custom_call.1} parent=1 // pred_check
      _
    $region11: #{tpu_custom_call.1} parent=1 // pred_check_branch
      %36 = sbr.rel (0) target = $region13
    $region12: #{tpu_custom_call.1} parent=1 // pred_region
      _
    $region13: #{tpu_custom_call.1} parent=1 // pred_fallthru
      _
    // Predicated region
    $region14: #{tpu_custom_call.1} parent=1 // pred_check
      _
    $region15: #{tpu_custom_call.1} parent=1 // pred_check_branch
      %38 = sbr.rel (0) target = $region17
    $region16: #{tpu_custom_call.1} parent=1 // pred_region
      %s40 = ssub.s32 5120, 5120
      %41 = vsyncadd [#allocation6], %s40
      %s42 = sshll.u32 [#allocation7], 4
      %s43 = int_to_ptr.vmem [resolvable:$true] %s42
      %48 = dma.hbm_to_vmem [thread:$0]  %s3, 5120, %s43, [#allocation6], 64, 64, 4
    $region17: #{tpu_custom_call.1} parent=1 // pred_fallthru
      _
    // Predicated region
    $region18: #{tpu_custom_call.1} parent=1 // pred_check
      _
    $region19: #{tpu_custom_call.1} parent=1 // pred_check_branch
      %50 = sbr.rel (0) target = $region21
    $region20: #{tpu_custom_call.1} parent=1 // pred_region
      _
    $region21: #{tpu_custom_call.1} parent=1 // pred_fallthru
      _
    // Predicated region
    $region22: #{tpu_custom_call.1} parent=1 // pred_check
      _
    $region23: #{tpu_custom_call.1} parent=1 // pred_check_branch
      %52 = sbr.rel (0) target = $region25
    $region24: #{tpu_custom_call.1} parent=1 // pred_region
      %53 = dma.done [#allocation3], 64
    $region25: #{tpu_custom_call.1} parent=1 // pred_fallthru
      _
    // Predicated region
    $region26: #{tpu_custom_call.1} parent=1 // pred_check
      _
    $region27: #{tpu_custom_call.1} parent=1 // pred_check_branch
      %55 = sbr.rel (0) target = $region29
    $region28: #{tpu_custom_call.1} parent=1 // pred_region
      %56 = dma.done [#allocation6], 5120
    $region29: #{tpu_custom_call.1} parent=1 // pred_fallthru
      _
    // Predicated region
    $region30: #{tpu_custom_call.1} parent=1 // pred_check
      _
    $region31: #{tpu_custom_call.1} parent=1 // pred_check_branch
      %58 = sbr.rel (0) target = $region33
    $region32: #{tpu_custom_call.1} parent=1 // pred_region
      %59 = dma.done [#allocation6], 5120
    $region33: #{tpu_custom_call.1} parent=1 // pred_fallthru
      _
    %v61 = vld [vmem:[#allocation2] sm:$0xf]
    %v62 = vld [vmem:[#allocation5] sm:$0xff]
    %v63 = vld [vmem:[#allocation5 + $0x8] sm:$0xff]
    %v64 = vld [vmem:[#allocation5 + $0x10] sm:$0xf]
    %v65 = vld [vmem:[#allocation5 + $0x14] sm:$0xff]
    %v66 = vld [vmem:[#allocation5 + $0x1c] sm:$0xff]
    %v67 = vld [vmem:[#allocation5 + $0x24] sm:$0xf]
    %v68 = vld [vmem:[#allocation5 + $0x28] sm:$0xff]
    %v69 = vld [vmem:[#allocation5 + $0x30] sm:$0xff]
    %v70 = vld [vmem:[#allocation5 + $0x38] sm:$0xf]
    %v71 = vld [vmem:[#allocation5 + $0x3c] sm:$0xff]
    %v72 = vld [vmem:[#allocation5 + $0x44] sm:$0xff]
    %v73 = vld [vmem:[#allocation5 + $0x4c] sm:$0xf]
    %v74 = vld [vmem:[#allocation5 + $0x50] sm:$0xff]
    %v75 = vld [vmem:[#allocation5 + $0x58] sm:$0xff]
    %v76 = vld [vmem:[#allocation5 + $0x60] sm:$0xf]
    %v77 = vld [vmem:[#allocation5 + $0x64] sm:$0xff]
    %v78 = vld [vmem:[#allocation5 + $0x6c] sm:$0xff]
    %v79 = vld [vmem:[#allocation5 + $0x74] sm:$0xf]
    %v80 = vld [vmem:[#allocation5 + $0x78] sm:$0xff]
    %v81 = vld [vmem:[#allocation5 + $0x80] sm:$0xff]
    %v82 = vld [vmem:[#allocation5 + $0x88] sm:$0xf]
    %v83 = vld [vmem:[#allocation5 + $0x8c] sm:$0xff]
    %v84 = vld [vmem:[#allocation5 + $0x94] sm:$0xff]
    %v85 = vld [vmem:[#allocation5 + $0x9c] sm:$0xf]
    %v86 = vld [vmem:[#allocation5 + $0xa0] sm:$0xff]
    %v87 = vld [vmem:[#allocation5 + $0xa8] sm:$0xff]
    %v88 = vld [vmem:[#allocation5 + $0xb0] sm:$0xf]
    %v89 = vld [vmem:[#allocation5 + $0xb4] sm:$0xff]
    %v90 = vld [vmem:[#allocation5 + $0xbc] sm:$0xff]
    %v91 = vld [vmem:[#allocation5 + $0xc4] sm:$0xf]
    %v92 = vld [vmem:[#allocation5 + $0xc8] sm:$0xff]
    %v93 = vld [vmem:[#allocation5 + $0xd0] sm:$0xff]
    %v94 = vld [vmem:[#allocation5 + $0xd8] sm:$0xf]
    %v95 = vld [vmem:[#allocation5 + $0xdc] sm:$0xff]
    %v96 = vld [vmem:[#allocation5 + $0xe4] sm:$0xff]
    %v97 = vld [vmem:[#allocation5 + $0xec] sm:$0xf]
    %v98 = vld [vmem:[#allocation5 + $0xf0] sm:$0xff]
    %v99 = vld [vmem:[#allocation5 + $0xf8] sm:$0xff]
    %v100 = vld [vmem:[#allocation5 + $0x100] sm:$0xf]
    %v101 = vld [vmem:[#allocation5 + $0x104] sm:$0xff]
    %v102 = vld [vmem:[#allocation5 + $0x10c] sm:$0xff]
    %v103 = vld [vmem:[#allocation5 + $0x114] sm:$0xf]
    %v104 = vld [vmem:[#allocation5 + $0x118] sm:$0xff]
    %v105 = vld [vmem:[#allocation5 + $0x120] sm:$0xff]
    %v106 = vld [vmem:[#allocation5 + $0x128] sm:$0xf]
    %v107 = vld [vmem:[#allocation5 + $0x12c] sm:$0xff]
    %v108 = vld [vmem:[#allocation5 + $0x134] sm:$0xff]
    %v109 = vld [vmem:[#allocation5 + $0x13c] sm:$0xf]
    %v110 = vld [vmem:[%s2] sm:$0x1f]
    %v112 = vlaneseq
    %v113 = vshrl.u32 %v112, 7
    %v114 = vsub.s32 0, %v113
    %v115 = vrot.slane %v110, %v114
    %v116 = vlaneseq
    %v117 = vshrl.u32 %v116, 7
    %v118 = vsub.s32 1, %v117
    %v119 = vrot.slane %v110, %v118
    %v120 = vlaneseq
    %v121 = vshrl.u32 %v120, 7
    %v122 = vsub.s32 2, %v121
    %v123 = vrot.slane %v110, %v122
    %v124 = vlaneseq
    %v125 = vshrl.u32 %v124, 7
    %v126 = vsub.s32 3, %v125
    %v127 = vrot.slane %v110, %v126
    %v128 = vlaneseq
    %v129 = vshrl.u32 %v128, 7
    %v130 = vsub.s32 4, %v129
    %v131 = vrot.slane %v110, %v130
    %v185 = vunpack.c.l.b16 %v62
    %v186 = vunpack.c.h.b16 %v62
    %v187 = vunpack.c.l.b16 %v63
    %v188 = vunpack.c.h.b16 %v63
    %v189 = vunpack.c.l.b16 %v64
    %v190 = vunpack.c.l.b16 %v65
    %v191 = vunpack.c.h.b16 %v65
    %v192 = vunpack.c.l.b16 %v66
    %v193 = vunpack.c.h.b16 %v66
    %v194 = vunpack.c.l.b16 %v67
    %v195 = vunpack.c.l.b16 %v68
    %v196 = vunpack.c.h.b16 %v68
    %v197 = vunpack.c.l.b16 %v69
    %v198 = vunpack.c.h.b16 %v69
    %v199 = vunpack.c.l.b16 %v70
    %v200 = vunpack.c.l.b16 %v71
    %v201 = vunpack.c.h.b16 %v71
    %v202 = vunpack.c.l.b16 %v72
    %v203 = vunpack.c.h.b16 %v72
    %v204 = vunpack.c.l.b16 %v73
    %v205 = vunpack.c.l.b16 %v74
    %v206 = vunpack.c.h.b16 %v74
    %v207 = vunpack.c.l.b16 %v75
    %v208 = vunpack.c.h.b16 %v75
    %v209 = vunpack.c.l.b16 %v76
    %v210 = vunpack.c.l.b16 %v77
    %v211 = vunpack.c.h.b16 %v77
    %v212 = vunpack.c.l.b16 %v78
    %v213 = vunpack.c.h.b16 %v78
    %v214 = vunpack.c.l.b16 %v79
    %v215 = vunpack.c.l.b16 %v80
    %v216 = vunpack.c.h.b16 %v80
    %v217 = vunpack.c.l.b16 %v81
    %v218 = vunpack.c.h.b16 %v81
    %v219 = vunpack.c.l.b16 %v82
    %v220 = vunpack.c.l.b16 %v83
    %v221 = vunpack.c.h.b16 %v83
    %v222 = vunpack.c.l.b16 %v84
    %v223 = vunpack.c.h.b16 %v84
    %v224 = vunpack.c.l.b16 %v85
    %v225 = vunpack.c.l.b16 %v86
    %v226 = vunpack.c.h.b16 %v86
    %v227 = vunpack.c.l.b16 %v87
    %v228 = vunpack.c.h.b16 %v87
    %v229 = vunpack.c.l.b16 %v88
    %v230 = vunpack.c.l.b16 %v89
    %v231 = vunpack.c.h.b16 %v89
    %v232 = vunpack.c.l.b16 %v90
    %v233 = vunpack.c.h.b16 %v90
    %v234 = vunpack.c.l.b16 %v91
    %v235 = vunpack.c.l.b16 %v92
    %v236 = vunpack.c.h.b16 %v92
    %v237 = vunpack.c.l.b16 %v93
    %v238 = vunpack.c.h.b16 %v93
    %v239 = vunpack.c.l.b16 %v94
    %v240 = vunpack.c.l.b16 %v95
    %v241 = vunpack.c.h.b16 %v95
    %v242 = vunpack.c.l.b16 %v96
    %v243 = vunpack.c.h.b16 %v96
    %v244 = vunpack.c.l.b16 %v97
    %v245 = vunpack.c.l.b16 %v98
    %v246 = vunpack.c.h.b16 %v98
    %v247 = vunpack.c.l.b16 %v99
    %v248 = vunpack.c.h.b16 %v99
    %v249 = vunpack.c.l.b16 %v100
    %v250 = vunpack.c.l.b16 %v101
    %v251 = vunpack.c.h.b16 %v101
    %v252 = vunpack.c.l.b16 %v102
    %v253 = vunpack.c.h.b16 %v102
    %v254 = vunpack.c.l.b16 %v103
    %v255 = vunpack.c.l.b16 %v104
    %v256 = vunpack.c.h.b16 %v104
    %v257 = vunpack.c.l.b16 %v105
    %v258 = vunpack.c.h.b16 %v105
    %v259 = vunpack.c.l.b16 %v106
    %v260 = vunpack.c.l.b16 %v107
    %v261 = vunpack.c.h.b16 %v107
    %v262 = vunpack.c.l.b16 %v108
    %v263 = vunpack.c.h.b16 %v108
    %v264 = vunpack.c.l.b16 %v109
    %v265 = vpack.c.b16 %v190, %v185
    %v266 = vpack.c.b16 %v191, %v186
    %v267 = vpack.c.b16 %v192, %v187
    %v268 = vpack.c.b16 %v193, %v188
    %v269 = vpack.c.b16 %v194, %v189
    %v270 = vpack.c.b16 %v200, %v195
    %v271 = vpack.c.b16 %v201, %v196
    %v272 = vpack.c.b16 %v202, %v197
    %v273 = vpack.c.b16 %v203, %v198
    %v274 = vpack.c.b16 %v204, %v199
    %v275 = vpack.c.b16 %v210, %v205
    %v276 = vpack.c.b16 %v211, %v206
    %v277 = vpack.c.b16 %v212, %v207
    %v278 = vpack.c.b16 %v213, %v208
    %v279 = vpack.c.b16 %v214, %v209
    %v280 = vpack.c.b16 %v220, %v215
    %v281 = vpack.c.b16 %v221, %v216
    %v282 = vpack.c.b16 %v222, %v217
    %v283 = vpack.c.b16 %v223, %v218
    %v284 = vpack.c.b16 %v224, %v219
    %v285 = vpack.c.b16 %v230, %v225
    %v286 = vpack.c.b16 %v231, %v226
    %v287 = vpack.c.b16 %v232, %v227
    %v288 = vpack.c.b16 %v233, %v228
    %v289 = vpack.c.b16 %v234, %v229
    %v290 = vpack.c.b16 %v240, %v235
    %v291 = vpack.c.b16 %v241, %v236
    %v292 = vpack.c.b16 %v242, %v237
    %v293 = vpack.c.b16 %v243, %v238
    %v294 = vpack.c.b16 %v244, %v239
    %v295 = vpack.c.b16 %v250, %v245
    %v296 = vpack.c.b16 %v251, %v246
    %v297 = vpack.c.b16 %v252, %v247
    %v298 = vpack.c.b16 %v253, %v248
    %v299 = vpack.c.b16 %v254, %v249
    %v300 = vpack.c.b16 %v260, %v255
    %v301 = vpack.c.b16 %v261, %v256
    %v302 = vpack.c.b16 %v262, %v257
    %v303 = vpack.c.b16 %v263, %v258
    %v304 = vpack.c.b16 %v264, %v259
    %345 = vmatprep.subr.bf16.mxu0 %v266
    %346 = vmatpush1.bf16.msra.mxu0 %v265
    %347 = vmatprep.subr.bf16.mxu0 %v271
    %348 = vmatpush1.bf16.msra.mxu0 %v270
    %349 = vmatprep.subr.bf16.mxu0 %v276
    %350 = vmatpush1.bf16.msra.mxu0 %v275
    %351 = vmatprep.subr.bf16.mxu0 %v281
    %352 = vmatpush1.bf16.msra.mxu0 %v280
    %353 = vmatprep.subr.bf16.mxu0 %v286
    %354 = vmatpush1.bf16.msra.mxu0 %v285
    %355 = vmatprep.subr.bf16.mxu0 %v291
    %356 = vmatpush1.bf16.msra.mxu0 %v290
    %357 = vmatprep.subr.bf16.mxu0 %v296
    %358 = vmatpush1.bf16.msra.mxu0 %v295
    %359 = vmatprep.subr.bf16.mxu0 %v301
    %360 = vmatpush1.bf16.msra.mxu0 %v300
    %361 = vmatprep.subr.bf16.mxu0 0
    %362 = vmatpush1.bf16.msra.mxu0 0
    %363 = vmatprep.subr.bf16.mxu0 0
    %364 = vmatpush1.bf16.msra.mxu0 0
    %365 = vmatprep.subr.bf16.mxu0 0
    %366 = vmatpush1.bf16.msra.mxu0 0
    %367 = vmatprep.subr.bf16.mxu0 0
    %368 = vmatpush1.bf16.msra.mxu0 0
    %369 = vmatprep.subr.bf16.mxu0 0
    %370 = vmatpush1.bf16.msra.mxu0 0
    %371 = vmatprep.subr.bf16.mxu0 0
    %372 = vmatpush1.bf16.msra.mxu0 0
    %373 = vmatprep.subr.bf16.mxu0 0
    %374 = vmatpush1.bf16.msra.mxu0 0
    %375 = vmatprep.subr.bf16.mxu0 0
    %376 = vmatpush1.bf16.msra.mxu0 0
    %377 = vmatprep.mubr.bf16.mxu0 0
    %378 = vmatmul.mubr.bf16.gmra.mrb[0].mxu0 %v61
    %v379 = vpop.f32.mrb[0].mxu0
    %v380 = vadd.f32 %v115, %v379
    %v381 = vpop.f32.mrb[0].mxu0
    %v382 = vadd.f32 %v119, %v381
    %v383 = vpop.f32.mrb[0].mxu0
    %v384 = vpop.f32.mrb[0].mxu0
    %385 = vdwg.mxu0
    %386 = vmatprep.subr.bf16.mxu0 %v268
    %387 = vmatpush1.bf16.msra.mxu0 %v267
    %388 = vmatprep.subr.bf16.mxu0 %v273
    %389 = vmatpush1.bf16.msra.mxu0 %v272
    %390 = vmatprep.subr.bf16.mxu0 %v278
    %391 = vmatpush1.bf16.msra.mxu0 %v277
    %392 = vmatprep.subr.bf16.mxu0 %v283
    %393 = vmatpush1.bf16.msra.mxu0 %v282
    %394 = vmatprep.subr.bf16.mxu0 %v288
    %395 = vmatpush1.bf16.msra.mxu0 %v287
    %396 = vmatprep.subr.bf16.mxu0 %v293
    %397 = vmatpush1.bf16.msra.mxu0 %v292
    %398 = vmatprep.subr.bf16.mxu0 %v298
    %399 = vmatpush1.bf16.msra.mxu0 %v297
    %400 = vmatprep.subr.bf16.mxu0 %v303
    %401 = vmatpush1.bf16.msra.mxu0 %v302
    %402 = vmatprep.subr.bf16.mxu0 0
    %403 = vmatpush1.bf16.msra.mxu0 0
    %404 = vmatprep.subr.bf16.mxu0 0
    %405 = vmatpush1.bf16.msra.mxu0 0
    %406 = vmatprep.subr.bf16.mxu0 0
    %407 = vmatpush1.bf16.msra.mxu0 0
    %408 = vmatprep.subr.bf16.mxu0 0
    %409 = vmatpush1.bf16.msra.mxu0 0
    %410 = vmatprep.subr.bf16.mxu0 0
    %411 = vmatpush1.bf16.msra.mxu0 0
    %412 = vmatprep.subr.bf16.mxu0 0
    %413 = vmatpush1.bf16.msra.mxu0 0
    %414 = vmatprep.subr.bf16.mxu0 0
    %415 = vmatpush1.bf16.msra.mxu0 0
    %416 = vmatprep.subr.bf16.mxu0 0
    %417 = vmatpush1.bf16.msra.mxu0 0
    %418 = vmatprep.mubr.bf16.mxu0 0
    %419 = vmatmul.mubr.bf16.gmra.mrb[0].mxu0 %v61
    %v420 = vpop.f32.mrb[0].mxu0
    %v421 = vadd.f32 %v123, %v420
    %v422 = vpop.f32.mrb[0].mxu0
    %v423 = vadd.f32 %v127, %v422
    %v424 = vpop.f32.mrb[0].mxu0
    %v425 = vpop.f32.mrb[0].mxu0
    %426 = vdwg.mxu0
    %427 = vmatprep.subr.bf16.mxu0 0
    %428 = vmatpush1.bf16.msra.mxu0 %v269
    %429 = vmatprep.subr.bf16.mxu0 0
    %430 = vmatpush1.bf16.msra.mxu0 %v274
    %431 = vmatprep.subr.bf16.mxu0 0
    %432 = vmatpush1.bf16.msra.mxu0 %v279
    %433 = vmatprep.subr.bf16.mxu0 0
    %434 = vmatpush1.bf16.msra.mxu0 %v284
    %435 = vmatprep.subr.bf16.mxu0 0
    %436 = vmatpush1.bf16.msra.mxu0 %v289
    %437 = vmatprep.subr.bf16.mxu0 0
    %438 = vmatpush1.bf16.msra.mxu0 %v294
    %439 = vmatprep.subr.bf16.mxu0 0
    %440 = vmatpush1.bf16.msra.mxu0 %v299
    %441 = vmatprep.subr.bf16.mxu0 0
    %442 = vmatpush1.bf16.msra.mxu0 %v304
    %443 = vmatprep.subr.bf16.mxu0 0
    %444 = vmatpush1.bf16.msra.mxu0 0
    %445 = vmatprep.subr.bf16.mxu0 0
    %446 = vmatpush1.bf16.msra.mxu0 0
    %447 = vmatprep.subr.bf16.mxu0 0
    %448 = vmatpush1.bf16.msra.mxu0 0
    %449 = vmatprep.subr.bf16.mxu0 0
    %450 = vmatpush1.bf16.msra.mxu0 0
    %451 = vmatprep.subr.bf16.mxu0 0
    %452 = vmatpush1.bf16.msra.mxu0 0
    %453 = vmatprep.subr.bf16.mxu0 0
    %454 = vmatpush1.bf16.msra.mxu0 0
    %455 = vmatprep.subr.bf16.mxu0 0
    %456 = vmatpush1.bf16.msra.mxu0 0
    %457 = vmatprep.subr.bf16.mxu0 0
    %458 = vmatpush1.bf16.msra.mxu0 0
    %459 = vmatprep.mubr.bf16.mxu0 0
    %460 = vmatmul.mubr.bf16.gmra.mrb[0].mxu0 %v61
    %v461 = vpop.f32.mrb[0].mxu0
    %v462 = vadd.f32 %v131, %v461
    %v463 = vpop.f32.mrb[0].mxu0
    %v464 = vpop.f32.mrb[0].mxu0
    %v465 = vpop.f32.mrb[0].mxu0
    %466 = vdwg.mxu0
    %v467 = vmax.f32 %v380, 0.0
    %v468 = vmax.f32 %v382, 0.0
    %v469 = vmax.f32 %v421, 0.0
    %v470 = vmax.f32 %v423, 0.0
    %v471 = vmax.f32 %v462, 0.0
    %v472 = vpack.c.bf16 %v467, %v467
    %v473 = vpack.c.bf16 %v468, %v468
    %v474 = vpack.c.bf16 %v469, %v469
    %v475 = vpack.c.bf16 %v470, %v470
    %v476 = vpack.c.bf16 %v471, %v471
    %v477 = vld [vmem:[#allocation7] sm:$0xf]
    %v478 = vld [vmem:[#allocation7 + $0x4] sm:$0xf]
    %v479 = vld [vmem:[#allocation7 + $0x8] sm:$0xf]
    %v480 = vld [vmem:[#allocation7 + $0xc] sm:$0xf]
    %v481 = vld [vmem:[#allocation7 + $0x10] sm:$0xf]
    %v482 = vld [vmem:[#allocation7 + $0x14] sm:$0xf]
    %v483 = vld [vmem:[#allocation7 + $0x18] sm:$0xf]
    %v484 = vld [vmem:[#allocation7 + $0x1c] sm:$0xf]
    %v485 = vld [vmem:[#allocation7 + $0x20] sm:$0xf]
    %v486 = vld [vmem:[#allocation7 + $0x24] sm:$0xf]
    %v487 = vld [vmem:[#allocation7 + $0x28] sm:$0xf]
    %v488 = vld [vmem:[#allocation7 + $0x2c] sm:$0xf]
    %v489 = vld [vmem:[#allocation7 + $0x30] sm:$0xf]
    %v490 = vld [vmem:[#allocation7 + $0x34] sm:$0xf]
    %v491 = vld [vmem:[#allocation7 + $0x38] sm:$0xf]
    %v492 = vld [vmem:[#allocation7 + $0x3c] sm:$0xf]
    %v493 = vld [vmem:[#allocation7 + $0x40] sm:$0xf]
    %v494 = vld [vmem:[#allocation7 + $0x44] sm:$0xf]
    %v495 = vld [vmem:[#allocation7 + $0x48] sm:$0xf]
    %v496 = vld [vmem:[#allocation7 + $0x4c] sm:$0xf]
    %v497 = vld [vmem:[#allocation7 + $0x50] sm:$0xf]
    %v498 = vld [vmem:[#allocation7 + $0x54] sm:$0xf]
    %v499 = vld [vmem:[#allocation7 + $0x58] sm:$0xf]
    %v500 = vld [vmem:[#allocation7 + $0x5c] sm:$0xf]
    %v501 = vld [vmem:[#allocation7 + $0x60] sm:$0xf]
    %v502 = vld [vmem:[#allocation7 + $0x64] sm:$0xf]
    %v503 = vld [vmem:[#allocation7 + $0x68] sm:$0xf]
    %v504 = vld [vmem:[#allocation7 + $0x6c] sm:$0xf]
    %v505 = vld [vmem:[#allocation7 + $0x70] sm:$0xf]
    %v506 = vld [vmem:[#allocation7 + $0x74] sm:$0xf]
    %v507 = vld [vmem:[#allocation7 + $0x78] sm:$0xf]
    %v508 = vld [vmem:[#allocation7 + $0x7c] sm:$0xf]
    %v509 = vld [vmem:[#allocation7 + $0x80] sm:$0xf]
    %v510 = vld [vmem:[#allocation7 + $0x84] sm:$0xf]
    %v511 = vld [vmem:[#allocation7 + $0x88] sm:$0xf]
    %v512 = vld [vmem:[#allocation7 + $0x8c] sm:$0xf]
    %v513 = vld [vmem:[#allocation7 + $0x90] sm:$0xf]
    %v514 = vld [vmem:[#allocation7 + $0x94] sm:$0xf]
    %v515 = vld [vmem:[#allocation7 + $0x98] sm:$0xf]
    %v516 = vld [vmem:[#allocation7 + $0x9c] sm:$0xf]
    %v517 = vld [vmem:[#allocation7 + $0xa0] sm:$0xf]
    %v518 = vld [vmem:[#allocation7 + $0xa4] sm:$0xf]
    %v519 = vld [vmem:[#allocation7 + $0xa8] sm:$0xf]
    %v520 = vld [vmem:[#allocation7 + $0xac] sm:$0xf]
    %v521 = vld [vmem:[#allocation7 + $0xb0] sm:$0xf]
    %v522 = vld [vmem:[#allocation7 + $0xb4] sm:$0xf]
    %v523 = vld [vmem:[#allocation7 + $0xb8] sm:$0xf]
    %v524 = vld [vmem:[#allocation7 + $0xbc] sm:$0xf]
    %v525 = vld [vmem:[#allocation7 + $0xc0] sm:$0xf]
    %v526 = vld [vmem:[#allocation7 + $0xc4] sm:$0xf]
    %v527 = vld [vmem:[#allocation7 + $0xc8] sm:$0xf]
    %v528 = vld [vmem:[#allocation7 + $0xcc] sm:$0xf]
    %v529 = vld [vmem:[#allocation7 + $0xd0] sm:$0xf]
    %v530 = vld [vmem:[#allocation7 + $0xd4] sm:$0xf]
    %v531 = vld [vmem:[#allocation7 + $0xd8] sm:$0xf]
    %v532 = vld [vmem:[#allocation7 + $0xdc] sm:$0xf]
    %v533 = vld [vmem:[#allocation7 + $0xe0] sm:$0xf]
    %v534 = vld [vmem:[#allocation7 + $0xe4] sm:$0xf]
    %v535 = vld [vmem:[#allocation7 + $0xe8] sm:$0xf]
    %v536 = vld [vmem:[#allocation7 + $0xec] sm:$0xf]
    %v537 = vld [vmem:[#allocation7 + $0xf0] sm:$0xf]
    %v538 = vld [vmem:[#allocation7 + $0xf4] sm:$0xf]
    %v539 = vld [vmem:[#allocation7 + $0xf8] sm:$0xf]
    %v540 = vld [vmem:[#allocation7 + $0xfc] sm:$0xf]
    %v541 = vld [vmem:[#allocation7 + $0x100] sm:$0xf]
    %v542 = vld [vmem:[#allocation7 + $0x104] sm:$0xf]
    %v543 = vld [vmem:[#allocation7 + $0x108] sm:$0xf]
    %v544 = vld [vmem:[#allocation7 + $0x10c] sm:$0xf]
    %v545 = vld [vmem:[#allocation7 + $0x110] sm:$0xf]
    %v546 = vld [vmem:[#allocation7 + $0x114] sm:$0xf]
    %v547 = vld [vmem:[#allocation7 + $0x118] sm:$0xf]
    %v548 = vld [vmem:[#allocation7 + $0x11c] sm:$0xf]
    %v549 = vld [vmem:[#allocation7 + $0x120] sm:$0xf]
    %v550 = vld [vmem:[#allocation7 + $0x124] sm:$0xf]
    %v551 = vld [vmem:[#allocation7 + $0x128] sm:$0xf]
    %v552 = vld [vmem:[#allocation7 + $0x12c] sm:$0xf]
    %v553 = vld [vmem:[#allocation7 + $0x130] sm:$0xf]
    %v554 = vld [vmem:[#allocation7 + $0x134] sm:$0xf]
    %v555 = vld [vmem:[#allocation7 + $0x138] sm:$0xf]
    %v556 = vld [vmem:[#allocation7 + $0x13c] sm:$0xf]
    %v557 = vld [vmem:[%s4] sm:$0x1]
    %v559 = vlaneseq
    %v560 = vshrl.u32 %v559, 7
    %v561 = vsub.s32 0, %v560
    %v562 = vrot.slane %v557, %v561
    %v644 = vunpack.c.l.b16 %v477
    %v645 = vunpack.c.l.b16 %v478
    %v646 = vunpack.c.l.b16 %v479
    %v647 = vunpack.c.l.b16 %v480
    %v648 = vunpack.c.l.b16 %v481
    %v649 = vunpack.c.l.b16 %v482
    %v650 = vunpack.c.l.b16 %v483
    %v651 = vunpack.c.l.b16 %v484
    %v652 = vunpack.c.l.b16 %v485
    %v653 = vunpack.c.l.b16 %v486
    %v654 = vunpack.c.l.b16 %v487
    %v655 = vunpack.c.l.b16 %v488
    %v656 = vunpack.c.l.b16 %v489
    %v657 = vunpack.c.l.b16 %v490
    %v658 = vunpack.c.l.b16 %v491
    %v659 = vunpack.c.l.b16 %v492
    %v660 = vunpack.c.l.b16 %v493
    %v661 = vunpack.c.l.b16 %v494
    %v662 = vunpack.c.l.b16 %v495
    %v663 = vunpack.c.l.b16 %v496
    %v664 = vunpack.c.l.b16 %v497
    %v665 = vunpack.c.l.b16 %v498
    %v666 = vunpack.c.l.b16 %v499
    %v667 = vunpack.c.l.b16 %v500
    %v668 = vunpack.c.l.b16 %v501
    %v669 = vunpack.c.l.b16 %v502
    %v670 = vunpack.c.l.b16 %v503
    %v671 = vunpack.c.l.b16 %v504
    %v672 = vunpack.c.l.b16 %v505
    %v673 = vunpack.c.l.b16 %v506
    %v674 = vunpack.c.l.b16 %v507
    %v675 = vunpack.c.l.b16 %v508
    %v676 = vunpack.c.l.b16 %v509
    %v677 = vunpack.c.l.b16 %v510
    %v678 = vunpack.c.l.b16 %v511
    %v679 = vunpack.c.l.b16 %v512
    %v680 = vunpack.c.l.b16 %v513
    %v681 = vunpack.c.l.b16 %v514
    %v682 = vunpack.c.l.b16 %v515
    %v683 = vunpack.c.l.b16 %v516
    %v684 = vunpack.c.l.b16 %v517
    %v685 = vunpack.c.l.b16 %v518
    %v686 = vunpack.c.l.b16 %v519
    %v687 = vunpack.c.l.b16 %v520
    %v688 = vunpack.c.l.b16 %v521
    %v689 = vunpack.c.l.b16 %v522
    %v690 = vunpack.c.l.b16 %v523
    %v691 = vunpack.c.l.b16 %v524
    %v692 = vunpack.c.l.b16 %v525
    %v693 = vunpack.c.l.b16 %v526
    %v694 = vunpack.c.l.b16 %v527
    %v695 = vunpack.c.l.b16 %v528
    %v696 = vunpack.c.l.b16 %v529
    %v697 = vunpack.c.l.b16 %v530
    %v698 = vunpack.c.l.b16 %v531
    %v699 = vunpack.c.l.b16 %v532
    %v700 = vunpack.c.l.b16 %v533
    %v701 = vunpack.c.l.b16 %v534
    %v702 = vunpack.c.l.b16 %v535
    %v703 = vunpack.c.l.b16 %v536
    %v704 = vunpack.c.l.b16 %v537
    %v705 = vunpack.c.l.b16 %v538
    %v706 = vunpack.c.l.b16 %v539
    %v707 = vunpack.c.l.b16 %v540
    %v708 = vunpack.c.l.b16 %v541
    %v709 = vunpack.c.l.b16 %v542
    %v710 = vunpack.c.l.b16 %v543
    %v711 = vunpack.c.l.b16 %v544
    %v712 = vunpack.c.l.b16 %v545
    %v713 = vunpack.c.l.b16 %v546
    %v714 = vunpack.c.l.b16 %v547
    %v715 = vunpack.c.l.b16 %v548
    %v716 = vunpack.c.l.b16 %v549
    %v717 = vunpack.c.l.b16 %v550
    %v718 = vunpack.c.l.b16 %v551
    %v719 = vunpack.c.l.b16 %v552
    %v720 = vunpack.c.l.b16 %v553
    %v721 = vunpack.c.l.b16 %v554
    %v722 = vunpack.c.l.b16 %v555
    %v723 = vunpack.c.l.b16 %v556
    %v724 = vpack.c.b16 %v645, %v644
    %v725 = vpack.c.b16 %v647, %v646
    %v726 = vpack.c.b16 %v649, %v648
    %v727 = vpack.c.b16 %v651, %v650
    %v728 = vpack.c.b16 %v653, %v652
    %v729 = vpack.c.b16 %v655, %v654
    %v730 = vpack.c.b16 %v657, %v656
    %v731 = vpack.c.b16 %v659, %v658
    %v732 = vpack.c.b16 %v661, %v660
    %v733 = vpack.c.b16 %v663, %v662
    %v734 = vpack.c.b16 %v665, %v664
    %v735 = vpack.c.b16 %v667, %v666
    %v736 = vpack.c.b16 %v669, %v668
    %v737 = vpack.c.b16 %v671, %v670
    %v738 = vpack.c.b16 %v673, %v672
    %v739 = vpack.c.b16 %v675, %v674
    %v740 = vpack.c.b16 %v677, %v676
    %v741 = vpack.c.b16 %v679, %v678
    %v742 = vpack.c.b16 %v681, %v680
    %v743 = vpack.c.b16 %v683, %v682
    %v744 = vpack.c.b16 %v685, %v684
    %v745 = vpack.c.b16 %v687, %v686
    %v746 = vpack.c.b16 %v689, %v688
    %v747 = vpack.c.b16 %v691, %v690
    %v748 = vpack.c.b16 %v693, %v692
    %v749 = vpack.c.b16 %v695, %v694
    %v750 = vpack.c.b16 %v697, %v696
    %v751 = vpack.c.b16 %v699, %v698
    %v752 = vpack.c.b16 %v701, %v700
    %v753 = vpack.c.b16 %v703, %v702
    %v754 = vpack.c.b16 %v705, %v704
    %v755 = vpack.c.b16 %v707, %v706
    %v756 = vpack.c.b16 %v709, %v708
    %v757 = vpack.c.b16 %v711, %v710
    %v758 = vpack.c.b16 %v713, %v712
    %v759 = vpack.c.b16 %v715, %v714
    %v760 = vpack.c.b16 %v717, %v716
    %v761 = vpack.c.b16 %v719, %v718
    %v762 = vpack.c.b16 %v721, %v720
    %v763 = vpack.c.b16 %v723, %v722
    %804 = vmatprep.subr.bf16.mxu0 0
    %805 = vmatpush1.bf16.msra.mxu0 %v724
    %806 = vmatprep.subr.bf16.mxu0 0
    %807 = vmatpush1.bf16.msra.mxu0 %v725
    %808 = vmatprep.subr.bf16.mxu0 0
    %809 = vmatpush1.bf16.msra.mxu0 %v726
    %810 = vmatprep.subr.bf16.mxu0 0
    %811 = vmatpush1.bf16.msra.mxu0 %v727
    %812 = vmatprep.subr.bf16.mxu0 0
    %813 = vmatpush1.bf16.msra.mxu0 %v728
    %814 = vmatprep.subr.bf16.mxu0 0
    %815 = vmatpush1.bf16.msra.mxu0 %v729
    %816 = vmatprep.subr.bf16.mxu0 0
    %817 = vmatpush1.bf16.msra.mxu0 %v730
    %818 = vmatprep.subr.bf16.mxu0 0
    %819 = vmatpush1.bf16.msra.mxu0 %v731
    %820 = vmatprep.subr.bf16.mxu0 0
    %821 = vmatpush1.bf16.msra.mxu0 %v732
    %822 = vmatprep.subr.bf16.mxu0 0
    %823 = vmatpush1.bf16.msra.mxu0 %v733
    %824 = vmatprep.subr.bf16.mxu0 0
    %825 = vmatpush1.bf16.msra.mxu0 %v734
    %826 = vmatprep.subr.bf16.mxu0 0
    %827 = vmatpush1.bf16.msra.mxu0 %v735
    %828 = vmatprep.subr.bf16.mxu0 0
    %829 = vmatpush1.bf16.msra.mxu0 %v736
    %830 = vmatprep.subr.bf16.mxu0 0
    %831 = vmatpush1.bf16.msra.mxu0 %v737
    %832 = vmatprep.subr.bf16.mxu0 0
    %833 = vmatpush1.bf16.msra.mxu0 %v738
    %834 = vmatprep.subr.bf16.mxu0 0
    %835 = vmatpush1.bf16.msra.mxu0 %v739
    %836 = vmatprep.mubr.bf16.mxu0 %v473
    %837 = vmatmul.mubr.bf16.gmra.mrb[0].mxu0 %v472
    %v838 = vpop.f32.mrb[0].mxu0
    %v839 = vadd.f32 %v562, %v838
    %v840 = vpop.f32.mrb[0].mxu0
    %v841 = vpop.f32.mrb[0].mxu0
    %v842 = vpop.f32.mrb[0].mxu0
    %843 = vdwg.mxu0
    %844 = vmatprep.subr.bf16.mxu0 0
    %845 = vmatpush1.bf16.msra.mxu0 %v740
    %846 = vmatprep.subr.bf16.mxu0 0
    %847 = vmatpush1.bf16.msra.mxu0 %v741
    %848 = vmatprep.subr.bf16.mxu0 0
    %849 = vmatpush1.bf16.msra.mxu0 %v742
    %850 = vmatprep.subr.bf16.mxu0 0
    %851 = vmatpush1.bf16.msra.mxu0 %v743
    %852 = vmatprep.subr.bf16.mxu0 0
    %853 = vmatpush1.bf16.msra.mxu0 %v744
    %854 = vmatprep.subr.bf16.mxu0 0
    %855 = vmatpush1.bf16.msra.mxu0 %v745
    %856 = vmatprep.subr.bf16.mxu0 0
    %857 = vmatpush1.bf16.msra.mxu0 %v746
    %858 = vmatprep.subr.bf16.mxu0 0
    %859 = vmatpush1.bf16.msra.mxu0 %v747
    %860 = vmatprep.subr.bf16.mxu0 0
    %861 = vmatpush1.bf16.msra.mxu0 %v748
    %862 = vmatprep.subr.bf16.mxu0 0
    %863 = vmatpush1.bf16.msra.mxu0 %v749
    %864 = vmatprep.subr.bf16.mxu0 0
    %865 = vmatpush1.bf16.msra.mxu0 %v750
    %866 = vmatprep.subr.bf16.mxu0 0
    %867 = vmatpush1.bf16.msra.mxu0 %v751
    %868 = vmatprep.subr.bf16.mxu0 0
    %869 = vmatpush1.bf16.msra.mxu0 %v752
    %870 = vmatprep.subr.bf16.mxu0 0
    %871 = vmatpush1.bf16.msra.mxu0 %v753
    %872 = vmatprep.subr.bf16.mxu0 0
    %873 = vmatpush1.bf16.msra.mxu0 %v754
    %874 = vmatprep.subr.bf16.mxu0 0
    %875 = vmatpush1.bf16.msra.mxu0 %v755
    %876 = vmatprep.mubr.bf16.mxu0 %v475
    %877 = vmatmul.mubr.bf16.gmra.mrb[0].mxu0 %v474
    %v878 = vpop.f32.mrb[0].mxu0
    %v879 = vadd.f32 %v839, %v878
    %v880 = vpop.f32.mrb[0].mxu0
    %v881 = vpop.f32.mrb[0].mxu0
    %v882 = vpop.f32.mrb[0].mxu0
    %883 = vdwg.mxu0
    %884 = vmatprep.subr.bf16.mxu0 0
    %885 = vmatpush1.bf16.msra.mxu0 %v756
    %886 = vmatprep.subr.bf16.mxu0 0
    %887 = vmatpush1.bf16.msra.mxu0 %v757
    %888 = vmatprep.subr.bf16.mxu0 0
    %889 = vmatpush1.bf16.msra.mxu0 %v758
    %890 = vmatprep.subr.bf16.mxu0 0
    %891 = vmatpush1.bf16.msra.mxu0 %v759
    %892 = vmatprep.subr.bf16.mxu0 0
    %893 = vmatpush1.bf16.msra.mxu0 %v760
    %894 = vmatprep.subr.bf16.mxu0 0
    %895 = vmatpush1.bf16.msra.mxu0 %v761
    %896 = vmatprep.subr.bf16.mxu0 0
    %897 = vmatpush1.bf16.msra.mxu0 %v762
    %898 = vmatprep.subr.bf16.mxu0 0
    %899 = vmatpush1.bf16.msra.mxu0 %v763
    %900 = vmatprep.subr.bf16.mxu0 0
    %901 = vmatpush1.bf16.msra.mxu0 0
    %902 = vmatprep.subr.bf16.mxu0 0
    %903 = vmatpush1.bf16.msra.mxu0 0
    %904 = vmatprep.subr.bf16.mxu0 0
    %905 = vmatpush1.bf16.msra.mxu0 0
    %906 = vmatprep.subr.bf16.mxu0 0
    %907 = vmatpush1.bf16.msra.mxu0 0
    %908 = vmatprep.subr.bf16.mxu0 0
    %909 = vmatpush1.bf16.msra.mxu0 0
    %910 = vmatprep.subr.bf16.mxu0 0
    %911 = vmatpush1.bf16.msra.mxu0 0
    %912 = vmatprep.subr.bf16.mxu0 0
    %913 = vmatpush1.bf16.msra.mxu0 0
    %914 = vmatprep.subr.bf16.mxu0 0
    %915 = vmatpush1.bf16.msra.mxu0 0
    %916 = vmatprep.mubr.bf16.mxu0 0
    %917 = vmatmul.mubr.bf16.gmra.mrb[0].mxu0 %v476
    %v918 = vpop.f32.mrb[0].mxu0
    %v919 = vadd.f32 %v879, %v918
    %v920 = vpop.f32.mrb[0].mxu0
    %v921 = vpop.f32.mrb[0].mxu0
    %v922 = vpop.f32.mrb[0].mxu0
    %923 = vdwg.mxu0
    %924 = vst [vmem:[#allocation8] sm:$0xff] %v919
    // Predicated region
    $region34: #{tpu_custom_call.1} parent=1 // pred_check
      _
    $region35: #{tpu_custom_call.1} parent=1 // pred_check_branch
      %926 = sbr.rel (0) target = $region37
    $region36: #{tpu_custom_call.1} parent=1 // pred_region
      %s928 = ssub.s32 128, 128
      %929 = vsyncadd [#allocation4], %s928
      %s931 = sshll.u32 [#allocation8], 4
      %s932 = int_to_ptr.vmem [resolvable:$true] %s931
      %934 = dma.vmem_to_hbm [thread:$0]  %s932, 128, %s5, [#allocation4]
    $region37: #{tpu_custom_call.1} parent=1 // pred_fallthru
      _
    // Predicated region
    $region38: #{tpu_custom_call.1} parent=1 // pred_check
      _
    $region39: #{tpu_custom_call.1} parent=1 // pred_check_branch
      %936 = sbr.rel (0) target = $region41
    $region40: #{tpu_custom_call.1} parent=1 // pred_region
      %937 = dma.done [#allocation4], 128
    $region41: #{tpu_custom_call.1} parent=1 // pred_fallthru
      _
    %938 = vsyncpa [#allocation3], 1
    %939 = vsyncpa [#allocation6], 1
    %940 = vsyncpa [#allocation4], 1

</llo_original>
